<compile_context>
chip_gen: v7x
topology: tpu7x:2x2x1
jax: 0.10.0
libtpu: 0.0.40
codegen_flags: <defaults>
</compile_context>

<pallas_src>
import jax
import jax.numpy as jnp
from jax import lax
from jax.experimental import pallas as pl
from jax.experimental.pallas import tpu as pltpu

IN_FEATURES = 1 * 19 * 19   # 361
HIDDEN = 200
OUT_FEATURES = 2

H_PAD = 256                 # hidden 200 -> multiple of 128 (lanes)
N_PAD = 8                   # out 2 -> one sublane tile (output rows)
MAX_TILE_B = 2048           # multiple of 128; ~6 MiB double-buffered x tile in f32


def _round_up(x, m):
    return (x + m - 1) // m * m


def mlp_kernel(x_ref, w1_ref, b1_ref, w2t_ref, b2_ref, out_ref):
    # x_ref:  (tile_b, 361)  streamed          w1_ref: (361, H_PAD)   resident
    # b1_ref: (1, H_PAD)     resident          w2t_ref: (N_PAD, H_PAD) resident
    # b2_ref: (N_PAD, 1)     resident          out_ref: (N_PAD, tile_b)
    w1 = w1_ref[...]
    x = x_ref[...].astype(w1.dtype)            # cast in-kernel (free under DMA)
    h = jnp.dot(x, w1, preferred_element_type=jnp.float32) + b1_ref[...]
    h = jnp.maximum(h, 0.0)                    # ReLU in f32
    w2t = w2t_ref[...]
    h = h.astype(w2t.dtype)
    # (N_PAD, H_PAD) x (tile_b, H_PAD), contracting on H_PAD -> (N_PAD, tile_b)
    yt = lax.dot_general(w2t, h, (((1,), (1,)), ((), ())),
                         preferred_element_type=jnp.float32)
    out_ref[...] = (yt + b2_ref[...]).astype(out_ref.dtype)


def mlp_forward(x_nchw, w1, b1, w2, b2, *, compute_dtype=jnp.float32,
                max_tile_b=MAX_TILE_B):
    """x_nchw: (B, 1, 19, 19). w1: (361, 200), b1: (200,), w2: (200, 2), b2: (2,).
    Returns (B, 2) float32. compute_dtype=jnp.bfloat16 uses bf16 MXU operands."""
    B = x_nchw.shape[0]
    x2d = x_nchw.reshape(B, -1)                          # x.view(x.size(0), -1), no copy

    # dtype-aware sublane alignment for the streamed x tile: 8 (f32) / 16 (bf16) / 32 (i8)
    itemsize = jnp.dtype(x2d.dtype).itemsize
    sub = max(8, 32 // max(itemsize, 1))
    b_rows = _round_up(max(B, 1), sub)
    if b_rows != B:
        # Only ragged / tiny batches pay this tiny batch-dim pad (K stays un-padded).
        x2d = jnp.pad(x2d, ((0, b_rows - B), (0, 0)))

    # Batch tile: big enough to amortize per-step overhead, >=2 grid steps when
    # possible (v7x megacore), lane dim of the packed output stays a multiple of 128.
    if b_rows >= 256:
        tile_b = min(max_tile_b, _round_up(pl.cdiv(b_rows, 2), 128))
    else:
        tile_b = b_rows                                   # single grid step
    num_tiles = pl.cdiv(b_rows, tile_b)
    b_pad = num_tiles * tile_b                            # output lane extent

    # Tiny zero-pads on weights/biases only (numerically exact: padded hidden lanes
    # get 0 pre-activation, relu(0)=0, and padded W2^T columns/rows are 0).
    w1p = jnp.zeros((IN_FEATURES, H_PAD), compute_dtype).at[:, :HIDDEN].set(
        w1.astype(compute_dtype))
    b1p = jnp.zeros((1, H_PAD), jnp.float32).at[0, :HIDDEN].set(b1.astype(jnp.float32))
    w2tp = jnp.zeros((N_PAD, H_PAD), compute_dtype).at[:OUT_FEATURES, :HIDDEN].set(
        w2.T.astype(compute_dtype))
    b2p = jnp.zeros((N_PAD, 1), jnp.float32).at[:OUT_FEATURES, 0].set(
        b2.astype(jnp.float32))

    out = pl.pallas_call(
        mlp_kernel,
        out_shape=jax.ShapeDtypeStruct((N_PAD, b_pad), jnp.float32),
        grid=(num_tiles,),
        in_specs=[
            pl.BlockSpec((tile_b, IN_FEATURES), lambda i: (i, 0)),   # x: streamed, K un-padded
            pl.BlockSpec((IN_FEATURES, H_PAD), lambda i: (0, 0)),    # W1: resident
            pl.BlockSpec((1, H_PAD), lambda i: (0, 0)),              # b1: resident
            pl.BlockSpec((N_PAD, H_PAD), lambda i: (0, 0)),          # W2^T: resident
            pl.BlockSpec((N_PAD, 1), lambda i: (0, 0)),              # b2 (column): resident
        ],
        out_specs=pl.BlockSpec((N_PAD, tile_b), lambda i: (0, i)),   # lane-dense packed out
        compiler_params=pltpu.CompilerParams(
            dimension_semantics=("parallel",),                       # megacore on v7x
            vmem_limit_bytes=48 * 1024 * 1024,
        ),
    )(x2d, w1p, b1p, w2tp, b2p)

    # Unpack: keep the 2 real output features, drop padded batch rows, transpose back.
    return out[:OUT_FEATURES, :B].T


def init_params(key):
    """Deterministic init mimicking nn.Linear default (uniform +-1/sqrt(fan_in)).
    Weights are stored transposed: (in_features, out_features)."""
    k1, k2, k3, k4 = jax.random.split(key, 4)
    in1, h, out = IN_FEATURES, HIDDEN, OUT_FEATURES
    bound1 = 1.0 / jnp.sqrt(in1)
    bound2 = 1.0 / jnp.sqrt(h)
    w1 = jax.random.uniform(k1, (in1, h), jnp.float32, -bound1, bound1)
    b1 = jax.random.uniform(k2, (h,), jnp.float32, -bound1, bound1)
    w2 = jax.random.uniform(k3, (h, out), jnp.float32, -bound2, bound2)
    b2 = jax.random.uniform(k4, (out,), jnp.float32, -bound2, bound2)
    return w1, b1, w2, b2


def _reference(x_nchw, w1, b1, w2, b2):
    x2d = x_nchw.reshape(x_nchw.shape[0], -1)
    return jnp.maximum(x2d @ w1 + b1, 0.0) @ w2 + b2


if __name__ == "__main__":
    key = jax.random.PRNGKey(0)
    kx, kx2, kp = jax.random.split(key, 3)
    w1, b1, w2, b2 = init_params(kp)

    # Small demo batch (B=2) - single-tile path, batch padded 2 -> 8 rows internally.
    B = 2
    x = jax.random.normal(kx, (B, 1, 19, 19), jnp.float32)  # NCHW
    ref = _reference(x, w1, b1, w2, b2)

    y = mlp_forward(x, w1, b1, w2, b2, compute_dtype=jnp.float32)
    jax.block_until_ready(y)
    assert y.shape == (B, OUT_FEATURES)
    assert jnp.allclose(y, ref, atol=1e-4, rtol=1e-4)

    # bf16 MXU-operand path (perf option on all generations): loose-tolerance check.
    y_bf16 = mlp_forward(x, w1, b1, w2, b2, compute_dtype=jnp.bfloat16)
    jax.block_until_ready(y_bf16)
    assert y_bf16.shape == (B, OUT_FEATURES)
    assert jnp.allclose(y_bf16, ref, atol=2.5e-1, rtol=5e-2)

    # Multi-tile path (>=2 grid steps, partial last x block) correctness check.
    B2 = 272
    x_big = jax.random.normal(kx2, (B2, 1, 19, 19), jnp.float32)
    ref_big = _reference(x_big, w1, b1, w2, b2)
    y_big = mlp_forward(x_big, w1, b1, w2, b2, compute_dtype=jnp.float32)
    jax.block_until_ready(y_big)
    assert y_big.shape == (B2, OUT_FEATURES)
    assert jnp.allclose(y_big, ref_big, atol=1e-4, rtol=1e-4)

    print("KERNEL_OK")
</pallas_src>

<mosaic_0001>
module attributes {stable_mosaic.version = 11 : i64} {
  func.func @mlp_kernel(%arg0: i32, %arg1: memref<8x361xf32, #tpu.memory_space<vmem>>, %arg2: memref<361x256xf32, #tpu.memory_space<vmem>>, %arg3: memref<1x256xf32, #tpu.memory_space<vmem>>, %arg4: memref<8x256xf32, #tpu.memory_space<vmem>>, %arg5: memref<8x1xf32, #tpu.memory_space<vmem>>, %arg6: memref<8x8xf32, #tpu.memory_space<vmem>>) attributes {dimension_semantics = [#tpu.dimension_semantics<parallel>], iteration_bounds = array<i64: 1>, scalar_prefetch = 0 : i64, scratch_operands = 0 : i64, tpu.core_type = #tpu.core_type<tc>, window_params = [{transform_indices = @transform_0, window_bounds = array<i64: 8, 361>}, {pipeline_mode = #tpu.pipeline_mode<synchronous>, transform_indices = @transform_1, window_bounds = array<i64: 361, 256>}, {pipeline_mode = #tpu.pipeline_mode<synchronous>, transform_indices = @transform_2, window_bounds = array<i64: 1, 256>}, {pipeline_mode = #tpu.pipeline_mode<synchronous>, transform_indices = @transform_3, window_bounds = array<i64: 8, 256>}, {pipeline_mode = #tpu.pipeline_mode<synchronous>, transform_indices = @transform_4, window_bounds = array<i64: 8, 1>}, {transform_indices = @transform_5, window_bounds = array<i64: 8, 8>}]} {
    %c0 = arith.constant 0 : index
    %c0_0 = arith.constant 0 : index
    %0 = vector.load %arg2[%c0, %c0_0] : memref<361x256xf32, #tpu.memory_space<vmem>>, vector<361x256xf32>
    %c0_1 = arith.constant 0 : index
    %c0_2 = arith.constant 0 : index
    %1 = vector.load %arg1[%c0_1, %c0_2] : memref<8x361xf32, #tpu.memory_space<vmem>>, vector<8x361xf32>
    %cst = arith.constant dense<0.000000e+00> : vector<8x256xf32>
    %2 = tpu.matmul %1, %0, %cst {dimension_numbers = #tpu.dot_dimension_numbers<[1], [0], [0], [1], [0, 0, 1, 1], [], []>} : vector<8x361xf32>, vector<361x256xf32>, vector<8x256xf32> -> vector<8x256xf32>
    %c0_3 = arith.constant 0 : index
    %c0_4 = arith.constant 0 : index
    %3 = vector.load %arg3[%c0_3, %c0_4] : memref<1x256xf32, #tpu.memory_space<vmem>>, vector<1x256xf32>
    %4 = vector.broadcast %3 : vector<1x256xf32> to vector<8x256xf32>
    %5 = arith.addf %2, %4 : vector<8x256xf32>
    %cst_5 = arith.constant 0.000000e+00 : f32
    %6 = vector.broadcast %cst_5 : f32 to vector<8x256xf32>
    %7 = arith.maximumf %5, %6 : vector<8x256xf32>
    %c0_6 = arith.constant 0 : index
    %c0_7 = arith.constant 0 : index
    %8 = vector.load %arg4[%c0_6, %c0_7] : memref<8x256xf32, #tpu.memory_space<vmem>>, vector<8x256xf32>
    %cst_8 = arith.constant dense<0.000000e+00> : vector<8x8xf32>
    %9 = tpu.matmul %8, %7, %cst_8 {dimension_numbers = #tpu.dot_dimension_numbers<[1], [1], [0], [0], [0, 0, 1, 0], [], []>} : vector<8x256xf32>, vector<8x256xf32>, vector<8x8xf32> -> vector<8x8xf32>
    %c0_9 = arith.constant 0 : index
    %c0_10 = arith.constant 0 : index
    %10 = vector.load %arg5[%c0_9, %c0_10] : memref<8x1xf32, #tpu.memory_space<vmem>>, vector<8x1xf32>
    %11 = vector.broadcast %10 : vector<8x1xf32> to vector<8x8xf32>
    %12 = arith.addf %9, %11 : vector<8x8xf32>
    %c0_11 = arith.constant 0 : index
    %c0_12 = arith.constant 0 : index
    %13 = vector.load %arg6[%c0_11, %c0_12] : memref<8x8xf32, #tpu.memory_space<vmem>>, vector<8x8xf32>
    tpu.vector_store %arg6[%c0_11, %c0_12], %12 {strides = array<i32>} : memref<8x8xf32, #tpu.memory_space<vmem>>, vector<8x8xf32>,
    return
  }
  func.func @transform_0(%arg0: i32) -> (i32, i32) {
    %c0_i32 = arith.constant 0 : i32
    %c0_i32_0 = arith.constant 0 : i32
    return %arg0, %c0_i32 : i32, i32
  }
  func.func @transform_1(%arg0: i32) -> (i32, i32) {
    %c0_i32 = arith.constant 0 : i32
    %c0_i32_0 = arith.constant 0 : i32
    %c0_i32_1 = arith.constant 0 : i32
    return %c0_i32, %c0_i32_0 : i32, i32
  }
  func.func @transform_2(%arg0: i32) -> (i32, i32) {
    %c0_i32 = arith.constant 0 : i32
    %c0_i32_0 = arith.constant 0 : i32
    %c0_i32_1 = arith.constant 0 : i32
    return %c0_i32, %c0_i32_0 : i32, i32
  }
  func.func @transform_3(%arg0: i32) -> (i32, i32) {
    %c0_i32 = arith.constant 0 : i32
    %c0_i32_0 = arith.constant 0 : i32
    %c0_i32_1 = arith.constant 0 : i32
    return %c0_i32, %c0_i32_0 : i32, i32
  }
  func.func @transform_4(%arg0: i32) -> (i32, i32) {
    %c0_i32 = arith.constant 0 : i32
    %c0_i32_0 = arith.constant 0 : i32
    %c0_i32_1 = arith.constant 0 : i32
    return %c0_i32, %c0_i32_0 : i32, i32
  }
  func.func @transform_5(%arg0: i32) -> (i32, i32) {
    %c0_i32 = arith.constant 0 : i32
    %c0_i32_0 = arith.constant 0 : i32
    return %c0_i32, %arg0 : i32, i32
  }
}

</mosaic_0001>

<llo_original>
// kernel: tpu_custom_call.1
$region0: #{tpu_custom_call.1}
  #allocation0 [shape = 'u32[]', space=smem, size = 0x4, offset = 0x4, fixed_abs, tag = 'smem constant byte address 0x4 - core index']
  #allocation1 [shape = 'u32[144,128]{1,0:T(1,128)}', space=vmem, size = 0x12000, scoped, tag = 'internal scratch']
  %s0 = inlined_call_operand.hbm [shape: f32[8,361], index: 0, kind: input, shape index: {}]
  %s1 = inlined_call_operand.hbm [shape: f32[361,256], index: 1, kind: input, shape index: {}]
  %s2 = inlined_call_operand.vmem [shape: f32[1,256], index: 2, kind: input, shape index: {}]
  %s3 = inlined_call_operand.vmem [shape: f32[8,256], index: 3, kind: input, shape index: {}]
  %s4 = inlined_call_operand.vmem [shape: f32[8,1], index: 4, kind: input, shape index: {}]
  %s5 = inlined_call_operand.hbm [shape: f32[8,8], index: 5, kind: output, shape index: {}]
  %s6 = sld [smem:[#allocation0]]
  $region38: #{tpu_custom_call.1} parent=0
    _
  %s8 = ssub.s32 1, %s6
  %s9 = scalar_select 0, %s8, %s6
  $region1: #{tpu_custom_call.1} parent=0
    #allocation2 [shape = 'u8[12288]{0}', space=vmem, size = 0x3000, scoped, tag = 'input window, operand 0, single buffered']
    #allocation3 [shape = 's32[1]{0}', space=sflag, size = 0x4, scoped, tag = 'scoped memory for tpu_custom_call.1']
    #allocation4 [shape = 's32[1]{0}', space=sflag, size = 0x4, scoped, tag = 'scoped memory for tpu_custom_call.1']
    #allocation5 [shape = 'u8[376832]{0}', space=vmem, size = 0x5c000, scoped, tag = 'input window, operand 1, single buffered']
    #allocation6 [shape = 's32[1]{0}', space=sflag, size = 0x4, scoped, tag = 'scoped memory for tpu_custom_call.1']
    #allocation7 [shape = 'u8[4096]{0}', space=vmem, size = 0x1000, scoped, tag = 'output window, operand 0, single buffered']
    %10 = vsyncpa [#allocation3], 0
    %11 = vsyncpa [#allocation6], 0
    %12 = vsyncpa [#allocation4], 0
    // Predicated region
    $region2: #{tpu_custom_call.1} parent=1 // pred_check
      _
    $region3: #{tpu_custom_call.1} parent=1 // pred_check_branch
      %14 = sbr.rel (0) target = $region5
    $region4: #{tpu_custom_call.1} parent=1 // pred_region
      %s16 = ssub.s32 384, 384
      %17 = vsyncadd [#allocation3], %s16
      %s19 = sshll.u32 [#allocation2], 4
      %s20 = int_to_ptr.vmem [resolvable:$true] %s19
      %22 = dma.hbm_to_vmem [thread:$0]  %s0, 384, %s20, [#allocation3]
    $region5: #{tpu_custom_call.1} parent=1 // pred_fallthru
      _
    // Predicated region
    $region6: #{tpu_custom_call.1} parent=1 // pred_check
      _
    $region7: #{tpu_custom_call.1} parent=1 // pred_check_branch
      %24 = sbr.rel (0) target = $region9
    $region8: #{tpu_custom_call.1} parent=1 // pred_region
      %s26 = ssub.s32 11776, 11776
      %27 = vsyncadd [#allocation6], %s26
      %s28 = sshll.u32 [#allocation5], 4
      %s29 = int_to_ptr.vmem [resolvable:$true] %s28
      %34 = dma.hbm_to_vmem [thread:$0]  %s1, 11776, %s29, [#allocation6], 256, 256, 16
    $region9: #{tpu_custom_call.1} parent=1 // pred_fallthru
      _
    // Predicated region
    $region10: #{tpu_custom_call.1} parent=1 // pred_check
      _
    $region11: #{tpu_custom_call.1} parent=1 // pred_check_branch
      %36 = sbr.rel (0) target = $region13
    $region12: #{tpu_custom_call.1} parent=1 // pred_region
      _
    $region13: #{tpu_custom_call.1} parent=1 // pred_fallthru
      _
    // Predicated region
    $region14: #{tpu_custom_call.1} parent=1 // pred_check
      _
    $region15: #{tpu_custom_call.1} parent=1 // pred_check_branch
      %38 = sbr.rel (0) target = $region17
    $region16: #{tpu_custom_call.1} parent=1 // pred_region
      _
    $region17: #{tpu_custom_call.1} parent=1 // pred_fallthru
      _
    // Predicated region
    $region18: #{tpu_custom_call.1} parent=1 // pred_check
      _
    $region19: #{tpu_custom_call.1} parent=1 // pred_check_branch
      %40 = sbr.rel (0) target = $region21
    $region20: #{tpu_custom_call.1} parent=1 // pred_region
      _
    $region21: #{tpu_custom_call.1} parent=1 // pred_fallthru
      _
    // Predicated region
    $region22: #{tpu_custom_call.1} parent=1 // pred_check
      _
    $region23: #{tpu_custom_call.1} parent=1 // pred_check_branch
      %42 = sbr.rel (0) target = $region25
    $region24: #{tpu_custom_call.1} parent=1 // pred_region
      %43 = dma.done [#allocation3], 384
    $region25: #{tpu_custom_call.1} parent=1 // pred_fallthru
      _
    // Predicated region
    $region26: #{tpu_custom_call.1} parent=1 // pred_check
      _
    $region27: #{tpu_custom_call.1} parent=1 // pred_check_branch
      %45 = sbr.rel (0) target = $region29
    $region28: #{tpu_custom_call.1} parent=1 // pred_region
      %46 = dma.done [#allocation6], 11776
    $region29: #{tpu_custom_call.1} parent=1 // pred_fallthru
      _
    %v47 = vld [vmem:[#allocation5] sm:$0xff]
    %v48 = vld [vmem:[#allocation5 + $0x8] sm:$0xff]
    %v49 = vld [vmem:[#allocation5 + $0x10] sm:$0xff]
    %v50 = vld [vmem:[#allocation5 + $0x18] sm:$0xff]
    %v51 = vld [vmem:[#allocation5 + $0x20] sm:$0xff]
    %v52 = vld [vmem:[#allocation5 + $0x28] sm:$0xff]
    %v53 = vld [vmem:[#allocation5 + $0x30] sm:$0xff]
    %v54 = vld [vmem:[#allocation5 + $0x38] sm:$0xff]
    %v55 = vld [vmem:[#allocation5 + $0x40] sm:$0xff]
    %v56 = vld [vmem:[#allocation5 + $0x48] sm:$0xff]
    %v57 = vld [vmem:[#allocation5 + $0x50] sm:$0xff]
    %v58 = vld [vmem:[#allocation5 + $0x58] sm:$0xff]
    %v59 = vld [vmem:[#allocation5 + $0x60] sm:$0xff]
    %v60 = vld [vmem:[#allocation5 + $0x68] sm:$0xff]
    %v61 = vld [vmem:[#allocation5 + $0x70] sm:$0xff]
    %v62 = vld [vmem:[#allocation5 + $0x78] sm:$0xff]
    %v63 = vld [vmem:[#allocation5 + $0x80] sm:$0xff]
    %v64 = vld [vmem:[#allocation5 + $0x88] sm:$0xff]
    %v65 = vld [vmem:[#allocation5 + $0x90] sm:$0xff]
    %v66 = vld [vmem:[#allocation5 + $0x98] sm:$0xff]
    %v67 = vld [vmem:[#allocation5 + $0xa0] sm:$0xff]
    %v68 = vld [vmem:[#allocation5 + $0xa8] sm:$0xff]
    %v69 = vld [vmem:[#allocation5 + $0xb0] sm:$0xff]
    %v70 = vld [vmem:[#allocation5 + $0xb8] sm:$0xff]
    %v71 = vld [vmem:[#allocation5 + $0xc0] sm:$0xff]
    %v72 = vld [vmem:[#allocation5 + $0xc8] sm:$0xff]
    %v73 = vld [vmem:[#allocation5 + $0xd0] sm:$0xff]
    %v74 = vld [vmem:[#allocation5 + $0xd8] sm:$0xff]
    %v75 = vld [vmem:[#allocation5 + $0xe0] sm:$0xff]
    %v76 = vld [vmem:[#allocation5 + $0xe8] sm:$0xff]
    %v77 = vld [vmem:[#allocation5 + $0xf0] sm:$0xff]
    %v78 = vld [vmem:[#allocation5 + $0xf8] sm:$0xff]
    %v79 = vld [vmem:[#allocation5 + $0x100] sm:$0xff]
    %v80 = vld [vmem:[#allocation5 + $0x108] sm:$0xff]
    %v81 = vld [vmem:[#allocation5 + $0x110] sm:$0xff]
    %v82 = vld [vmem:[#allocation5 + $0x118] sm:$0xff]
    %v83 = vld [vmem:[#allocation5 + $0x120] sm:$0xff]
    %v84 = vld [vmem:[#allocation5 + $0x128] sm:$0xff]
    %v85 = vld [vmem:[#allocation5 + $0x130] sm:$0xff]
    %v86 = vld [vmem:[#allocation5 + $0x138] sm:$0xff]
    %v87 = vld [vmem:[#allocation5 + $0x140] sm:$0xff]
    %v88 = vld [vmem:[#allocation5 + $0x148] sm:$0xff]
    %v89 = vld [vmem:[#allocation5 + $0x150] sm:$0xff]
    %v90 = vld [vmem:[#allocation5 + $0x158] sm:$0xff]
    %v91 = vld [vmem:[#allocation5 + $0x160] sm:$0xff]
    %v92 = vld [vmem:[#allocation5 + $0x168] sm:$0xff]
    %v93 = vld [vmem:[#allocation5 + $0x170] sm:$0xff]
    %v94 = vld [vmem:[#allocation5 + $0x178] sm:$0xff]
    %v95 = vld [vmem:[#allocation5 + $0x180] sm:$0xff]
    %v96 = vld [vmem:[#allocation5 + $0x188] sm:$0xff]
    %v97 = vld [vmem:[#allocation5 + $0x190] sm:$0xff]
    %v98 = vld [vmem:[#allocation5 + $0x198] sm:$0xff]
    %v99 = vld [vmem:[#allocation5 + $0x1a0] sm:$0xff]
    %v100 = vld [vmem:[#allocation5 + $0x1a8] sm:$0xff]
    %v101 = vld [vmem:[#allocation5 + $0x1b0] sm:$0xff]
    %v102 = vld [vmem:[#allocation5 + $0x1b8] sm:$0xff]
    %v103 = vld [vmem:[#allocation5 + $0x1c0] sm:$0xff]
    %v104 = vld [vmem:[#allocation5 + $0x1c8] sm:$0xff]
    %v105 = vld [vmem:[#allocation5 + $0x1d0] sm:$0xff]
    %v106 = vld [vmem:[#allocation5 + $0x1d8] sm:$0xff]
    %v107 = vld [vmem:[#allocation5 + $0x1e0] sm:$0xff]
    %v108 = vld [vmem:[#allocation5 + $0x1e8] sm:$0xff]
    %v109 = vld [vmem:[#allocation5 + $0x1f0] sm:$0xff]
    %v110 = vld [vmem:[#allocation5 + $0x1f8] sm:$0xff]
    %v111 = vld [vmem:[#allocation5 + $0x200] sm:$0xff]
    %v112 = vld [vmem:[#allocation5 + $0x208] sm:$0xff]
    %v113 = vld [vmem:[#allocation5 + $0x210] sm:$0xff]
    %v114 = vld [vmem:[#allocation5 + $0x218] sm:$0xff]
    %v115 = vld [vmem:[#allocation5 + $0x220] sm:$0xff]
    %v116 = vld [vmem:[#allocation5 + $0x228] sm:$0xff]
    %v117 = vld [vmem:[#allocation5 + $0x230] sm:$0xff]
    %v118 = vld [vmem:[#allocation5 + $0x238] sm:$0xff]
    %v119 = vld [vmem:[#allocation5 + $0x240] sm:$0xff]
    %v120 = vld [vmem:[#allocation5 + $0x248] sm:$0xff]
    %v121 = vld [vmem:[#allocation5 + $0x250] sm:$0xff]
    %v122 = vld [vmem:[#allocation5 + $0x258] sm:$0xff]
    %v123 = vld [vmem:[#allocation5 + $0x260] sm:$0xff]
    %v124 = vld [vmem:[#allocation5 + $0x268] sm:$0xff]
    %v125 = vld [vmem:[#allocation5 + $0x270] sm:$0xff]
    %v126 = vld [vmem:[#allocation5 + $0x278] sm:$0xff]
    %v127 = vld [vmem:[#allocation5 + $0x280] sm:$0xff]
    %v128 = vld [vmem:[#allocation5 + $0x288] sm:$0xff]
    %v129 = vld [vmem:[#allocation5 + $0x290] sm:$0xff]
    %v130 = vld [vmem:[#allocation5 + $0x298] sm:$0xff]
    %v131 = vld [vmem:[#allocation5 + $0x2a0] sm:$0xff]
    %v132 = vld [vmem:[#allocation5 + $0x2a8] sm:$0xff]
    %v133 = vld [vmem:[#allocation5 + $0x2b0] sm:$0xff]
    %v134 = vld [vmem:[#allocation5 + $0x2b8] sm:$0xff]
    %v135 = vld [vmem:[#allocation5 + $0x2c0] sm:$0xff]
    %v136 = vld [vmem:[#allocation5 + $0x2c8] sm:$0xff]
    %v137 = vld [vmem:[#allocation5 + $0x2d0] sm:$0x1]
    %v138 = vld [vmem:[#allocation5 + $0x2d8] sm:$0x1]
    %v139 = vld [vmem:[#allocation2] sm:$0xff]
    %v140 = vld [vmem:[#allocation2 + $0x8] sm:$0xff]
    %v141 = vld [vmem:[#allocation2 + $0x10] sm:$0xff]
    %v142 = vld [vmem:[%s2] sm:$0x3]
    %v144 = vlaneseq
    %v145 = vshrl.u32 %v144, 7
    %v146 = vsub.s32 0, %v145
    %v147 = vrot.slane %v142, %v146
    %v148 = vlaneseq
    %v149 = vshrl.u32 %v148, 7
    %v150 = vsub.s32 1, %v149
    %v151 = vrot.slane %v142, %v150
    %vm154 = vcmask 859136
    %v156 = vsel %vm154, %v141, 0
    %vm158 = vcmask 1040384
    %v160 = vsel %vm158, %v137, 0
    %v163 = vsel %vm158, %v138, 0
    %165 = vmatprep.subr.mxu0 %v48
    %166 = vmatpush1.msra.mxu0 %v47
    %167 = vmatprep.subr.mxu0 %v50
    %168 = vmatpush1.msra.mxu0 %v49
    %169 = vmatprep.subr.mxu0 %v52
    %170 = vmatpush1.msra.mxu0 %v51
    %171 = vmatprep.subr.mxu0 %v54
    %172 = vmatpush1.msra.mxu0 %v53
    %173 = vmatprep.subr.mxu0 %v56
    %174 = vmatpush1.msra.mxu0 %v55
    %175 = vmatprep.subr.mxu0 %v58
    %176 = vmatpush1.msra.mxu0 %v57
    %177 = vmatprep.subr.mxu0 %v60
    %178 = vmatpush1.msra.mxu0 %v59
    %179 = vmatprep.subr.mxu0 %v62
    %180 = vmatpush1.msra.mxu0 %v61
    %181 = vmatprep.subr.mxu0 %v64
    %182 = vmatpush1.msra.mxu0 %v63
    %183 = vmatprep.subr.mxu0 %v66
    %184 = vmatpush1.msra.mxu0 %v65
    %185 = vmatprep.subr.mxu0 %v68
    %186 = vmatpush1.msra.mxu0 %v67
    %187 = vmatprep.subr.mxu0 %v70
    %188 = vmatpush1.msra.mxu0 %v69
    %189 = vmatprep.subr.mxu0 %v72
    %190 = vmatpush1.msra.mxu0 %v71
    %191 = vmatprep.subr.mxu0 %v74
    %192 = vmatpush1.msra.mxu0 %v73
    %193 = vmatprep.subr.mxu0 %v76
    %194 = vmatpush1.msra.mxu0 %v75
    %195 = vmatprep.subr.mxu0 %v78
    %196 = vmatpush1.msra.mxu0 %v77
    %197 = vmatprep.subr.mxu0 %v80
    %198 = vmatpush1.msra.mxu0 %v79
    %199 = vmatprep.subr.mxu0 %v82
    %200 = vmatpush1.msra.mxu0 %v81
    %201 = vmatprep.subr.mxu0 %v84
    %202 = vmatpush1.msra.mxu0 %v83
    %203 = vmatprep.subr.mxu0 %v86
    %204 = vmatpush1.msra.mxu0 %v85
    %205 = vmatprep.subr.mxu0 %v88
    %206 = vmatpush1.msra.mxu0 %v87
    %207 = vmatprep.subr.mxu0 %v90
    %208 = vmatpush1.msra.mxu0 %v89
    %209 = vmatprep.subr.mxu0 %v92
    %210 = vmatpush1.msra.mxu0 %v91
    %211 = vmatprep.subr.mxu0 %v94
    %212 = vmatpush1.msra.mxu0 %v93
    %213 = vmatprep.subr.mxu0 %v96
    %214 = vmatpush1.msra.mxu0 %v95
    %215 = vmatprep.subr.mxu0 %v98
    %216 = vmatpush1.msra.mxu0 %v97
    %217 = vmatprep.subr.mxu0 %v100
    %218 = vmatpush1.msra.mxu0 %v99
    %219 = vmatprep.subr.mxu0 %v102
    %220 = vmatpush1.msra.mxu0 %v101
    %221 = vmatprep.subr.mxu0 %v104
    %222 = vmatpush1.msra.mxu0 %v103
    %223 = vmatprep.subr.mxu0 %v106
    %224 = vmatpush1.msra.mxu0 %v105
    %225 = vmatprep.subr.mxu0 %v108
    %226 = vmatpush1.msra.mxu0 %v107
    %227 = vmatprep.subr.mxu0 %v110
    %228 = vmatpush1.msra.mxu0 %v109
    %229 = vmatprep.mubr.f32.mxu0 %v140
    %230 = vmatmul.mubr.f32.gmra.mrb[0].mxu0 %v139
    %v231 = vpop.f32.mrb[0].mxu0
    %v232 = vadd.f32 %v147, %v231
    %v233 = vpop.f32.mrb[0].mxu0
    %v234 = vadd.f32 %v151, %v233
    %235 = vdwg.mxu0
    %236 = vmatprep.subr.mxu0 %v112
    %237 = vmatpush1.msra.mxu0 %v111
    %238 = vmatprep.subr.mxu0 %v114
    %239 = vmatpush1.msra.mxu0 %v113
    %240 = vmatprep.subr.mxu0 %v116
    %241 = vmatpush1.msra.mxu0 %v115
    %242 = vmatprep.subr.mxu0 %v118
    %243 = vmatpush1.msra.mxu0 %v117
    %244 = vmatprep.subr.mxu0 %v120
    %245 = vmatpush1.msra.mxu0 %v119
    %246 = vmatprep.subr.mxu0 %v122
    %247 = vmatpush1.msra.mxu0 %v121
    %248 = vmatprep.subr.mxu0 %v124
    %249 = vmatpush1.msra.mxu0 %v123
    %250 = vmatprep.subr.mxu0 %v126
    %251 = vmatpush1.msra.mxu0 %v125
    %252 = vmatprep.subr.mxu0 %v128
    %253 = vmatpush1.msra.mxu0 %v127
    %254 = vmatprep.subr.mxu0 %v130
    %255 = vmatpush1.msra.mxu0 %v129
    %256 = vmatprep.subr.mxu0 %v132
    %257 = vmatpush1.msra.mxu0 %v131
    %258 = vmatprep.subr.mxu0 %v134
    %259 = vmatpush1.msra.mxu0 %v133
    %260 = vmatprep.subr.mxu0 %v136
    %261 = vmatpush1.msra.mxu0 %v135
    %262 = vmatprep.subr.mxu0 %v163
    %263 = vmatpush1.msra.mxu0 %v160
    %264 = vmatprep.subr.mxu0 0.0
    %265 = vmatpush1.msra.mxu0 0.0
    %266 = vmatprep.subr.mxu0 0.0
    %267 = vmatpush1.msra.mxu0 0.0
    %268 = vmatprep.subr.mxu0 0.0
    %269 = vmatpush1.msra.mxu0 0.0
    %270 = vmatprep.subr.mxu0 0.0
    %271 = vmatpush1.msra.mxu0 0.0
    %272 = vmatprep.subr.mxu0 0.0
    %273 = vmatpush1.msra.mxu0 0.0
    %274 = vmatprep.subr.mxu0 0.0
    %275 = vmatpush1.msra.mxu0 0.0
    %276 = vmatprep.subr.mxu0 0.0
    %277 = vmatpush1.msra.mxu0 0.0
    %278 = vmatprep.subr.mxu0 0.0
    %279 = vmatpush1.msra.mxu0 0.0
    %280 = vmatprep.subr.mxu0 0.0
    %281 = vmatpush1.msra.mxu0 0.0
    %282 = vmatprep.subr.mxu0 0.0
    %283 = vmatpush1.msra.mxu0 0.0
    %284 = vmatprep.subr.mxu0 0.0
    %285 = vmatpush1.msra.mxu0 0.0
    %286 = vmatprep.subr.mxu0 0.0
    %287 = vmatpush1.msra.mxu0 0.0
    %288 = vmatprep.subr.mxu0 0.0
    %289 = vmatpush1.msra.mxu0 0.0
    %290 = vmatprep.subr.mxu0 0.0
    %291 = vmatpush1.msra.mxu0 0.0
    %292 = vmatprep.subr.mxu0 0.0
    %293 = vmatpush1.msra.mxu0 0.0
    %294 = vmatprep.subr.mxu0 0.0
    %295 = vmatpush1.msra.mxu0 0.0
    %296 = vmatprep.subr.mxu0 0.0
    %297 = vmatpush1.msra.mxu0 0.0
    %298 = vmatprep.subr.mxu0 0.0
    %299 = vmatpush1.msra.mxu0 0.0
    %300 = vmatprep.mubr.f32.mxu0 0.0
    %301 = vmatmul.mubr.f32.gmra.mrb[0].mxu0 %v156
    %v302 = vpop.f32.mrb[0].mxu0
    %v303 = vadd.f32 %v232, %v302
    %v304 = vpop.f32.mrb[0].mxu0
    %v305 = vadd.f32 %v234, %v304
    %306 = vdwg.mxu0
    %v307 = vmax.f32 %v303, 0.0
    %v308 = vmax.f32 %v305, 0.0
    %v309 = vld [vmem:[%s3] sm:$0xff]
    %v310 = vld [vmem:[%s3 + $0x8] sm:$0xff]
    %v311 = vld [vmem:[%s4] sm:$0xff]
    %313 = vset.pattern.permute.xlu0 0
    %314 = vperm.xlu0 %313, %v311
    %v315 = vpop.permute.xlu0 %314
    %317 = vmatprep.subr.mxu0 %v308
    %318 = vmatpush1.xpose.msra.mxu0 %v307
    %319 = vmatprep.subr.mxu0 0.0
    %320 = vmatpush1.xpose.msra.mxu0 0.0
    %321 = vmatprep.subr.mxu0 0.0
    %322 = vmatpush1.xpose.msra.mxu0 0.0
    %323 = vmatprep.subr.mxu0 0.0
    %324 = vmatpush1.xpose.msra.mxu0 0.0
    %325 = vmatprep.subr.mxu0 0.0
    %326 = vmatpush1.xpose.msra.mxu0 0.0
    %327 = vmatprep.subr.mxu0 0.0
    %328 = vmatpush1.xpose.msra.mxu0 0.0
    %329 = vmatprep.subr.mxu0 0.0
    %330 = vmatpush1.xpose.msra.mxu0 0.0
    %331 = vmatprep.subr.mxu0 0.0
    %332 = vmatpush1.xpose.msra.mxu0 0.0
    %333 = vmatprep.subr.mxu0 0.0
    %334 = vmatpush1.xpose.msra.mxu0 0.0
    %335 = vmatprep.subr.mxu0 0.0
    %336 = vmatpush1.xpose.msra.mxu0 0.0
    %337 = vmatprep.subr.mxu0 0.0
    %338 = vmatpush1.xpose.msra.mxu0 0.0
    %339 = vmatprep.subr.mxu0 0.0
    %340 = vmatpush1.xpose.msra.mxu0 0.0
    %341 = vmatprep.subr.mxu0 0.0
    %342 = vmatpush1.xpose.msra.mxu0 0.0
    %343 = vmatprep.subr.mxu0 0.0
    %344 = vmatpush1.xpose.msra.mxu0 0.0
    %345 = vmatprep.subr.mxu0 0.0
    %346 = vmatpush1.xpose.msra.mxu0 0.0
    %347 = vmatprep.subr.mxu0 0.0
    %348 = vmatpush1.xpose.msra.mxu0 0.0
    %349 = vmatprep.subr.mxu0 0.0
    %350 = vmatpush1.xpose.msra.mxu0 0.0
    %351 = vmatprep.subr.mxu0 0.0
    %352 = vmatpush1.xpose.msra.mxu0 0.0
    %353 = vmatprep.subr.mxu0 0.0
    %354 = vmatpush1.xpose.msra.mxu0 0.0
    %355 = vmatprep.subr.mxu0 0.0
    %356 = vmatpush1.xpose.msra.mxu0 0.0
    %357 = vmatprep.subr.mxu0 0.0
    %358 = vmatpush1.xpose.msra.mxu0 0.0
    %359 = vmatprep.subr.mxu0 0.0
    %360 = vmatpush1.xpose.msra.mxu0 0.0
    %361 = vmatprep.subr.mxu0 0.0
    %362 = vmatpush1.xpose.msra.mxu0 0.0
    %363 = vmatprep.subr.mxu0 0.0
    %364 = vmatpush1.xpose.msra.mxu0 0.0
    %365 = vmatprep.subr.mxu0 0.0
    %366 = vmatpush1.xpose.msra.mxu0 0.0
    %367 = vmatprep.subr.mxu0 0.0
    %368 = vmatpush1.xpose.msra.mxu0 0.0
    %369 = vmatprep.subr.mxu0 0.0
    %370 = vmatpush1.xpose.msra.mxu0 0.0
    %371 = vmatprep.subr.mxu0 0.0
    %372 = vmatpush1.xpose.msra.mxu0 0.0
    %373 = vmatprep.subr.mxu0 0.0
    %374 = vmatpush1.xpose.msra.mxu0 0.0
    %375 = vmatprep.subr.mxu0 0.0
    %376 = vmatpush1.xpose.msra.mxu0 0.0
    %377 = vmatprep.subr.mxu0 0.0
    %378 = vmatpush1.xpose.msra.mxu0 0.0
    %379 = vmatprep.subr.mxu0 0.0
    %380 = vmatpush1.xpose.msra.mxu0 0.0
    %381 = vmatprep.mubr.f32.mxu0 %v310
    %382 = vmatmul.mubr.f32.gmra.mrb[0].mxu0 %v309
    %v383 = vpop.f32.mrb[0].mxu0
    %v384 = vadd.f32 %v315, %v383
    %v385 = vpop.f32.mrb[0].mxu0
    %386 = vdwg.mxu0
    %vm387 = vcmask 64512
    %388 = vst.msk [vmem:[#allocation7] sm:$0xff] %vm387, %v384
    // Predicated region
    $region30: #{tpu_custom_call.1} parent=1 // pred_check
      _
    $region31: #{tpu_custom_call.1} parent=1 // pred_check_branch
      %390 = sbr.rel (0) target = $region33
    $region32: #{tpu_custom_call.1} parent=1 // pred_region
      %s392 = ssub.s32 128, 128
      %393 = vsyncadd [#allocation4], %s392
      %s395 = sshll.u32 [#allocation7], 4
      %s396 = int_to_ptr.vmem [resolvable:$true] %s395
      %398 = dma.vmem_to_hbm [thread:$0]  %s396, 128, %s5, [#allocation4]
    $region33: #{tpu_custom_call.1} parent=1 // pred_fallthru
      _
    // Predicated region
    $region34: #{tpu_custom_call.1} parent=1 // pred_check
      _
    $region35: #{tpu_custom_call.1} parent=1 // pred_check_branch
      %400 = sbr.rel (0) target = $region37
    $region36: #{tpu_custom_call.1} parent=1 // pred_region
      %401 = dma.done [#allocation4], 128
    $region37: #{tpu_custom_call.1} parent=1 // pred_fallthru
      _
    %402 = vsyncpa [#allocation3], 1
    %403 = vsyncpa [#allocation6], 1
    %404 = vsyncpa [#allocation4], 1

</llo_original>
